<compile_context>
chip_gen: v7x
topology: tpu7x:2x2x1
jax: 0.10.0
libtpu: 0.0.40
codegen_flags: <defaults>
</compile_context>

<pallas_src>
import jax
import jax.numpy as jnp
from jax.experimental import pallas as pl
from jax.experimental.pallas import tpu as pltpu


# ----------------------------------------------------------------------------
# Kernel 1: per-token activation fake-quant (a_qdq), hoisted out of the matmul
# so it is computed once per token instead of once per output-column tile.
# ----------------------------------------------------------------------------
def _act_quant_kernel(x_ref, q_ref, s_ref):
    x = x_ref[...].astype(jnp.float32)
    max_abs = jnp.max(jnp.abs(x), axis=-1, keepdims=True)
    scale = jnp.where(max_abs > 0.0, max_abs / 127.0, 1.0)
    q = jnp.clip(jnp.round(x / scale), -128.0, 127.0)
    q_ref[...] = q.astype(q_ref.dtype)   # integer codes: exact in bf16
    s_ref[...] = scale


# ----------------------------------------------------------------------------
# Kernel 2: tiled MXU matmul over integer codes (bf16 inputs, f32 accumulation).
# Scales and bias are applied exactly once to the f32 accumulator at the end.
# ----------------------------------------------------------------------------
def _qmatmul_kernel(xq_ref, wq_ref, sx_ref, sw_ref, b_ref, o_ref, acc_ref):
    k = pl.program_id(2)

    @pl.when(k == 0)
    def _():
        acc_ref[...] = jnp.zeros_like(acc_ref)

    acc_ref[...] += jnp.dot(xq_ref[...], wq_ref[...],
                            preferred_element_type=jnp.float32)

    @pl.when(k == pl.num_programs(2) - 1)
    def _():
        out = acc_ref[...] * sx_ref[...] * sw_ref[...] + b_ref[...]
        o_ref[...] = out.astype(o_ref.dtype)


# ----------------------------------------------------------------------------
# Parameter setup glue (module .new() time) and wrapper
# ----------------------------------------------------------------------------
def _round_up(x, m):
    return ((x + m - 1) // m) * m


def _pick_tile(dim, candidates):
    for c in candidates:
        if dim >= c and dim % c == 0:
            return c
    return dim  # full extent is always a legal block dim


def w_qdq_per_channel_int8(weight):
    """Stand-in for llmc w_qdq: per-output-channel symmetric int8 fake quant.
    Returns (integer codes, scales); the dequantized weight is q * scale."""
    max_abs = jnp.max(jnp.abs(weight), axis=-1, keepdims=True)
    scale = jnp.where(max_abs > 0.0, max_abs / 127.0, 1.0)
    q = jnp.clip(jnp.round(weight / scale), -128.0, 127.0)
    return q, scale


def prepare_linear_params(q_w, scale_w, bias, out_features):
    """One-time setup: pre-transpose + pre-cast weight codes, reshape scales/bias."""
    wq_t = q_w.T.astype(jnp.bfloat16)                      # (K, N) integer codes
    sw = scale_w.reshape(1, -1).astype(jnp.float32)        # (1, N)
    if bias is None:
        b2d = jnp.zeros((1, out_features), jnp.float32)
    else:
        b2d = bias.reshape(1, -1).astype(jnp.float32)
    return wq_t, sw, b2d


def efficient_fake_quant_linear(x, wq_t, sw, b2d):
    """x: (..., K); wq_t: (K, N) bf16 integer codes; sw, b2d: (1, N) f32."""
    orig_shape = x.shape
    K, N = wq_t.shape
    assert orig_shape[-1] == K

    x2d = x.reshape(-1, K)
    M = x2d.shape[0]

    # Tile selection (MXU fill + VMEM double-buffering on v5e/v6e/v7x).
    tm = min(256, _round_up(M, 8))
    M_pad = _round_up(M, tm)
    tn = _pick_tile(N, (512, 256, 128))
    tk = _pick_tile(K, (512, 256, 128))

    if M_pad != M:
        # zero rows -> max|x| = 0 -> scale 1, q 0; padded outputs sliced off below
        x2d = jnp.pad(x2d, ((0, M_pad - M), (0, 0)))

    # Pass-1 row tile: whole K per row lives in VMEM (f32 in + bf16 out,
    # double-buffered).  Cap rows so it stays well under the scoped VMEM limit.
    tm1 = tm
    while tm1 > 8 and tm1 % 2 == 0 and tm1 * K * (4 + 2) * 2 > 24 * 1024 * 1024:
        tm1 //= 2

    # ---- pass 1: per-token activation fake-quant (once, not per N tile) ----
    xq, sx = pl.pallas_call(
        _act_quant_kernel,
        out_shape=(jax.ShapeDtypeStruct((M_pad, K), jnp.bfloat16),
                   jax.ShapeDtypeStruct((M_pad, 1), jnp.float32)),
        grid_spec=pltpu.PrefetchScalarGridSpec(
            num_scalar_prefetch=0,
            grid=(M_pad // tm1,),
            in_specs=[pl.BlockSpec((tm1, K), lambda i: (i, 0))],
            out_specs=(pl.BlockSpec((tm1, K), lambda i: (i, 0)),
                       pl.BlockSpec((tm1, 1), lambda i: (i, 0))),
        ),
        compiler_params=pltpu.CompilerParams(
            dimension_semantics=("parallel",),
            vmem_limit_bytes=48 * 1024 * 1024),
    )(x2d)

    # ---- pass 2: (M, N, K)-tiled MXU matmul with f32 accumulator ----
    out_dtype = x.dtype
    cost = pl.CostEstimate(
        flops=2 * M_pad * N * K,
        transcendentals=0,
        bytes_accessed=(M_pad * K * 2 + K * N * 2
                        + M_pad * N * jnp.dtype(out_dtype).itemsize
                        + 2 * N * 4 + M_pad * 4))

    out = pl.pallas_call(
        _qmatmul_kernel,
        out_shape=jax.ShapeDtypeStruct((M_pad, N), out_dtype),
        grid_spec=pltpu.PrefetchScalarGridSpec(
            num_scalar_prefetch=0,
            grid=(M_pad // tm, N // tn, K // tk),
            in_specs=[
                pl.BlockSpec((tm, tk), lambda i, j, k: (i, k)),  # q(x)   bf16
                pl.BlockSpec((tk, tn), lambda i, j, k: (k, j)),  # q(W).T bf16
                pl.BlockSpec((tm, 1), lambda i, j, k: (i, 0)),   # per-token scale
                pl.BlockSpec((1, tn), lambda i, j, k: (0, j)),   # per-channel scale
                pl.BlockSpec((1, tn), lambda i, j, k: (0, j)),   # bias
            ],
            out_specs=pl.BlockSpec((tm, tn), lambda i, j, k: (i, j)),
            scratch_shapes=[pltpu.VMEM((tm, tn), jnp.float32)],
        ),
        compiler_params=pltpu.CompilerParams(
            dimension_semantics=("parallel", "parallel", "arbitrary"),
            vmem_limit_bytes=48 * 1024 * 1024),
        cost_estimate=cost,
    )(xq, wq_t, sx, sw, b2d)

    out = out[:M]
    return out.reshape(*orig_shape[:-1], N)


# ----------------------------------------------------------------------------
# Pure-JAX reference of the module forward (rotate=False)
# ----------------------------------------------------------------------------
def reference_forward(x, weight_fq, bias):
    max_abs = jnp.max(jnp.abs(x), axis=-1, keepdims=True)
    scale = jnp.where(max_abs > 0.0, max_abs / 127.0, 1.0)
    x_dq = jnp.clip(jnp.round(x / scale), -128.0, 127.0) * scale
    out = x_dq @ weight_fq.T
    if bias is not None:
        out = out + bias
    return out


if __name__ == "__main__":
    key = jax.random.PRNGKey(0)
    k_x, k_w, k_b = jax.random.split(key, 3)

    batch, seq, in_features, out_features = 2, 8, 128, 256

    x = jax.random.normal(k_x, (batch, seq, in_features), dtype=jnp.float32)
    w_raw = jax.random.normal(k_w, (out_features, in_features),
                              dtype=jnp.float32) * 0.05
    bias = jax.random.normal(k_b, (out_features,), dtype=jnp.float32) * 0.1

    # module .new(): weight is fake-quantized by w_qdq once; keep codes + scales
    q_w, scale_w = w_qdq_per_channel_int8(w_raw)
    weight_fq = q_w * scale_w                 # what the torch module stores
    wq_t, sw, b2d = prepare_linear_params(q_w, scale_w, bias, out_features)

    out = efficient_fake_quant_linear(x, wq_t, sw, b2d)
    out = jax.block_until_ready(out)

    ref = reference_forward(x, weight_fq, bias)
    assert out.shape == (batch, seq, out_features)
    err = float(jnp.max(jnp.abs(out - ref)))
    assert jnp.allclose(out, ref, atol=2e-3, rtol=2e-3), err

    # TODO(synk): online rotation (buf_rotate / rotater.rotate) is module-config
    # dependent and disabled by default; not implemented here.
    print("KERNEL_OK")
</pallas_src>

<mosaic_0001>
module attributes {stable_mosaic.version = 11 : i64} {
  func.func @_act_quant_kernel(%arg0: i32, %arg1: memref<16x128xf32, #tpu.memory_space<vmem>>, %arg2: memref<16x128xbf16, #tpu.memory_space<vmem>>, %arg3: memref<16x1xf32, #tpu.memory_space<vmem>>) attributes {dimension_semantics = [#tpu.dimension_semantics<parallel>], iteration_bounds = array<i64: 1>, scalar_prefetch = 0 : i64, scratch_operands = 0 : i64, tpu.core_type = #tpu.core_type<tc>, window_params = [{transform_indices = @transform_0, window_bounds = array<i64: 16, 128>}, {transform_indices = @transform_1, window_bounds = array<i64: 16, 128>}, {transform_indices = @transform_2, window_bounds = array<i64: 16, 1>}]} {
    %c0 = arith.constant 0 : index
    %c0_0 = arith.constant 0 : index
    %0 = vector.load %arg1[%c0, %c0_0] : memref<16x128xf32, #tpu.memory_space<vmem>>, vector<16x128xf32>
    %1 = math.absf %0 : vector<16x128xf32>
    %cst = arith.constant dense<0xFF800000> : vector<16xf32>
    %2 = vector.multi_reduction <maximumf>, %1, %cst [1] : vector<16x128xf32> to vector<16xf32>
    %3 = vector.shape_cast %2 : vector<16xf32> to vector<16x1xf32>
    %cst_1 = arith.constant 0.000000e+00 : f32
    %4 = vector.broadcast %cst_1 : f32 to vector<16x1xf32>
    %5 = arith.cmpf ogt, %3, %4 : vector<16x1xf32>
    %cst_2 = arith.constant 1.270000e+02 : f32
    %6 = vector.broadcast %cst_2 : f32 to vector<16x1xf32>
    %7 = arith.divf %3, %6 : vector<16x1xf32>
    %cst_3 = arith.constant 1.000000e+00 : f32
    %8 = vector.broadcast %cst_3 : f32 to vector<16x1xf32>
    %9 = arith.select %5, %7, %8 : vector<16x1xi1>, vector<16x1xf32>
    %10 = vector.broadcast %9 : vector<16x1xf32> to vector<16x128xf32>
    %11 = arith.divf %0, %10 : vector<16x128xf32>
    %12 = math.roundeven %11 : vector<16x128xf32>
    %cst_4 = arith.constant -1.280000e+02 : f32
    %cst_5 = arith.constant 1.270000e+02 : f32
    %13 = vector.broadcast %cst_4 : f32 to vector<16x128xf32>
    %14 = arith.maximumf %13, %12 : vector<16x128xf32>
    %15 = vector.broadcast %cst_5 : f32 to vector<16x128xf32>
    %16 = arith.minimumf %15, %14 : vector<16x128xf32>
    %17 = arith.truncf %16 : vector<16x128xf32> to vector<16x128xbf16>
    %c0_6 = arith.constant 0 : index
    %c0_7 = arith.constant 0 : index
    %18 = vector.load %arg2[%c0_6, %c0_7] : memref<16x128xbf16, #tpu.memory_space<vmem>>, vector<16x128xbf16>
    tpu.vector_store %arg2[%c0_6, %c0_7], %17 {strides = array<i32>} : memref<16x128xbf16, #tpu.memory_space<vmem>>, vector<16x128xbf16>,
    %c0_8 = arith.constant 0 : index
    %c0_9 = arith.constant 0 : index
    %19 = vector.load %arg3[%c0_8, %c0_9] : memref<16x1xf32, #tpu.memory_space<vmem>>, vector<16x1xf32>
    tpu.vector_store %arg3[%c0_8, %c0_9], %9 {strides = array<i32>} : memref<16x1xf32, #tpu.memory_space<vmem>>, vector<16x1xf32>,
    return
  }
  func.func @transform_0(%arg0: i32) -> (i32, i32) {
    %c0_i32 = arith.constant 0 : i32
    %c0_i32_0 = arith.constant 0 : i32
    return %arg0, %c0_i32 : i32, i32
  }
  func.func @transform_1(%arg0: i32) -> (i32, i32) {
    %c0_i32 = arith.constant 0 : i32
    %c0_i32_0 = arith.constant 0 : i32
    return %arg0, %c0_i32 : i32, i32
  }
  func.func @transform_2(%arg0: i32) -> (i32, i32) {
    %c0_i32 = arith.constant 0 : i32
    %c0_i32_0 = arith.constant 0 : i32
    return %arg0, %c0_i32 : i32, i32
  }
}

</mosaic_0001>

<llo_original>
// kernel: tpu_custom_call.1
$region0: #{tpu_custom_call.1}
  #allocation0 [shape = 'u32[]', space=smem, size = 0x4, offset = 0x4, fixed_abs, tag = 'smem constant byte address 0x4 - core index']
  #allocation1 [shape = 'u32[144,128]{1,0:T(1,128)}', space=vmem, size = 0x12000, scoped, tag = 'internal scratch']
  %s0 = inlined_call_operand.hbm [shape: f32[16,128], index: 0, kind: input, shape index: {}]
  %s1 = inlined_call_operand.hbm [shape: bf16[16,128], index: 1, kind: output, shape index: {0}]
  %s2 = inlined_call_operand.vmem [shape: f32[16,1], index: 2, kind: output, shape index: {1}]
  %3 = xla_tuple %s1, %s2
  %s4 = sld [smem:[#allocation0]]
  $region26: #{tpu_custom_call.1} parent=0
    _
  %s6 = ssub.s32 1, %s4
  %s7 = scalar_select 0, %s6, %s4
  $region1: #{tpu_custom_call.1} parent=0
    #allocation2 [shape = 'u8[8192]{0}', space=vmem, size = 0x2000, scoped, tag = 'input window, operand 0, single buffered']
    #allocation3 [shape = 's32[1]{0}', space=sflag, size = 0x4, scoped, tag = 'scoped memory for tpu_custom_call.1']
    #allocation4 [shape = 's32[1]{0}', space=sflag, size = 0x4, scoped, tag = 'scoped memory for tpu_custom_call.1']
    #allocation5 [shape = 'u8[4096]{0}', space=vmem, size = 0x1000, scoped, tag = 'output window, operand 0, single buffered']
    %8 = vsyncpa [#allocation3], 0
    %9 = vsyncpa [#allocation4], 0
    // Predicated region
    $region2: #{tpu_custom_call.1} parent=1 // pred_check
      _
    $region3: #{tpu_custom_call.1} parent=1 // pred_check_branch
      %11 = sbr.rel (0) target = $region5
    $region4: #{tpu_custom_call.1} parent=1 // pred_region
      %s13 = ssub.s32 256, 256
      %14 = vsyncadd [#allocation3], %s13
      %s15 = sshll.u32 [#allocation2], 4
      %s16 = int_to_ptr.vmem [resolvable:$true] %s15
      %21 = dma.hbm_to_vmem [thread:$0]  %s0, 256, %s16, [#allocation3], 128, 128, 8
    $region5: #{tpu_custom_call.1} parent=1 // pred_fallthru
      _
    // Predicated region
    $region6: #{tpu_custom_call.1} parent=1 // pred_check
      _
    $region7: #{tpu_custom_call.1} parent=1 // pred_check_branch
      %23 = sbr.rel (0) target = $region9
    $region8: #{tpu_custom_call.1} parent=1 // pred_region
      %24 = dma.done [#allocation3], 256
    $region9: #{tpu_custom_call.1} parent=1 // pred_fallthru
      _
    %v25 = vld [vmem:[#allocation2] sm:$0xff]
    %v26 = vld [vmem:[#allocation2 + $0x8] sm:$0xff]
    %v27 = vand.u32 2147483647, %v25
    %v28 = vand.u32 2147483647, %v26
    %29 = vmax.xlane.f32.xlu0 %v27
    %v30 = vpop.xlane.xlu0 %29
    %31 = vmax.xlane.f32.xlu0 %v28
    %v32 = vpop.xlane.xlu0 %31
    %vm33 = vcmp.gt.f32.partialorder %v30, 0.0
    %vm34 = vcmp.gt.f32.partialorder %v32, 0.0
    %v35 = vrcp.pop 127.0
    %v36 = vmul.f32 %v30, %v35
    %v37 = vmul.f32 %v32, %v35
    %v38 = vsel %vm33, %v36, 1.0
    %v39 = vsel %vm34, %v37, 1.0
    %v40 = vrcp.pop %v38
    %v41 = vmul.f32 %v25, %v40
    %v42 = vrcp.pop %v39
    %v43 = vmul.f32 %v26, %v42
    %v44 = vround.ne.pseudo %v41
    %v45 = vround.ne.pseudo %v43
    %v46 = vmax.f32 %v44, -128.0
    %v47 = vmax.f32 %v45, -128.0
    %v48 = vmin.f32 %v46, 127.0
    %v49 = vmin.f32 %v47, 127.0
    %v50 = vpack.c.bf16 %v49, %v48
    %v52 = vunpack.c.l.b16 %v50
    %v53 = vunpack.c.h.b16 %v50
    %v54 = vpack.c.b16 %v52, %v52
    %v55 = vpack.c.b16 %v53, %v53
    %58 = vst [vmem:[#allocation5] sm:$0xf] %v54
    %59 = vst [vmem:[#allocation5 + $0x4] sm:$0xf] %v55
    %vm60 = vcmask 7168
    %61 = vst.msk [vmem:[%s2] sm:$0xff] %vm60, %v38
    %62 = vst.msk [vmem:[%s2 + $0x8] sm:$0xff] %vm60, %v39
    // Predicated region
    $region10: #{tpu_custom_call.1} parent=1 // pred_check
      _
    $region11: #{tpu_custom_call.1} parent=1 // pred_check_branch
      %64 = sbr.rel (0) target = $region13
    $region12: #{tpu_custom_call.1} parent=1 // pred_region
      %s66 = ssub.s32 128, 128
      %67 = vsyncadd [#allocation4], %s66
      %s68 = sshll.u32 [#allocation5], 4
      %s69 = int_to_ptr.vmem [resolvable:$true] %s68
      %74 = dma.vmem_to_hbm [thread:$0]  %s69, 128, %s1, [#allocation4], 64, 64, 4
    $region13: #{tpu_custom_call.1} parent=1 // pred_fallthru
      _
    // Predicated region
    $region14: #{tpu_custom_call.1} parent=1 // pred_check
      _
    $region15: #{tpu_custom_call.1} parent=1 // pred_check_branch
      %76 = sbr.rel (0) target = $region17
    $region16: #{tpu_custom_call.1} parent=1 // pred_region
      _
    $region17: #{tpu_custom_call.1} parent=1 // pred_fallthru
      _
    // Predicated region
    $region18: #{tpu_custom_call.1} parent=1 // pred_check
      _
    $region19: #{tpu_custom_call.1} parent=1 // pred_check_branch
      %78 = sbr.rel (0) target = $region21
    $region20: #{tpu_custom_call.1} parent=1 // pred_region
      %79 = dma.done [#allocation4], 128
    $region21: #{tpu_custom_call.1} parent=1 // pred_fallthru
      _
    // Predicated region
    $region22: #{tpu_custom_call.1} parent=1 // pred_check
      _
    $region23: #{tpu_custom_call.1} parent=1 // pred_check_branch
      %81 = sbr.rel (0) target = $region25
    $region24: #{tpu_custom_call.1} parent=1 // pred_region
      _
    $region25: #{tpu_custom_call.1} parent=1 // pred_fallthru
      _
    %82 = vsyncpa [#allocation3], 1
    %83 = vsyncpa [#allocation4], 1

</llo_original>
